<compile_context>
chip_gen: v7x
topology: tpu7x:2x2x1
jax: 0.10.0
libtpu: 0.0.40
codegen_flags: <defaults>
</compile_context>

<pallas_src>
import functools

import jax
import jax.numpy as jnp
from jax.experimental import pallas as pl
from jax.experimental.pallas import tpu as pltpu


def _round_up(x, m):
    return (x + m - 1) // m * m


def _decoder_kernel(z_ref, w1_ref, b1_ref, w2_ref, b2_ref, o_ref):
    # Linear 1 on the MXU with f32 accumulation; bias + ReLU on the VPU.
    h = jnp.dot(z_ref[...], w1_ref[...], preferred_element_type=jnp.float32)
    h = jnp.maximum(h + b1_ref[...], 0.0)
    # Linear 2 on the MXU; b2 already carries the folded scalar sigmoid bias.
    h = h.astype(w2_ref.dtype)
    x = jnp.dot(h, w2_ref[...], preferred_element_type=jnp.float32)
    o_ref[...] = jax.nn.sigmoid(x + b2_ref[...]).astype(o_ref.dtype)


def make_appearance_decoder(w1, b1, w2, b2, *, object_size, color_channels,
                            bias=-2.0, block_m=512,
                            param_dtype=jnp.float32,
                            out_dtype=jnp.float32):
    """Build a jitted decoder closure with parameters prepped once.

    w1: (z_what_dim, H)  (transposed PyTorch Linear weight), b1: (H,),
    w2: (H, N), b2: (N,) with N = color_channels * object_size**2.
    Returned fn maps z_what (..., z_what_dim) -> (M, C, sz, sz), M = prod(...).
    """
    z_dim, H = w1.shape
    N = w2.shape[1]
    assert N == color_channels * object_size ** 2
    assert w2.shape[0] == H and b1.shape == (H,) and b2.shape == (N,)

    # --- One-time parameter prep (hoisted out of the per-call path). ---------
    w1_p = jnp.asarray(w1).astype(param_dtype)
    w2_p = jnp.asarray(w2).astype(param_dtype)
    b1_p = jnp.asarray(b1, jnp.float32).reshape(1, H)
    # Fold the scalar sigmoid bias into b2 once: sigmoid(h@w2 + b2 + bias).
    b2_p = (jnp.asarray(b2, jnp.float32) + bias).reshape(1, N)

    @jax.jit
    def decoder(z_what):
        z2d = z_what.reshape(-1, z_dim).astype(param_dtype)
        M = z2d.shape[0]

        # Row tile: multiple of 8 sublanes, capped at block_m, and sized so the
        # grid keeps >=4 steps (keeps both v7x TensorCores busy for modest M).
        TM = max(8, min(block_m, _round_up(pl.cdiv(M, 4), 8)))
        grid = (pl.cdiv(M, TM),)   # ragged last block; Pallas masks the write

        cost = pl.CostEstimate(
            flops=2 * M * (z_dim * H + H * N),
            transcendentals=M * N,
            bytes_accessed=(M * z_dim * jnp.dtype(param_dtype).itemsize
                            + (z_dim * H + H * N) * jnp.dtype(param_dtype).itemsize
                            + (H + N) * 4
                            + M * N * jnp.dtype(out_dtype).itemsize),
        )

        flat = pl.pallas_call(
            _decoder_kernel,
            out_shape=jax.ShapeDtypeStruct((M, N), out_dtype),
            grid=grid,
            in_specs=[
                pl.BlockSpec((TM, z_dim), lambda i: (i, 0)),   # rows tile over M
                pl.BlockSpec((z_dim, H), lambda i: (0, 0)),    # weights resident
                pl.BlockSpec((1, H), lambda i: (0, 0)),
                pl.BlockSpec((H, N), lambda i: (0, 0)),
                pl.BlockSpec((1, N), lambda i: (0, 0)),
            ],
            out_specs=pl.BlockSpec((TM, N), lambda i: (i, 0)),
            compiler_params=pltpu.CompilerParams(
                dimension_semantics=("parallel",)),
            cost_estimate=cost,
        )(z2d, w1_p, b1_p, w2_p, b2_p)

        # Matches torch .view(-1, ch, sz, sz); reshape is metadata-only.
        return flat.reshape(M, color_channels, object_size, object_size)

    return decoder


def _reference(z_what, w1, b1, w2, b2, object_size, color_channels, bias=-2.0):
    z2d = z_what.reshape(-1, z_what.shape[-1])
    h = jnp.maximum(z2d @ w1 + b1, 0.0)
    x = h @ w2 + b2
    x = x.reshape(-1, color_channels, object_size, object_size)
    return jax.nn.sigmoid(x + bias)


if __name__ == "__main__":
    # Small, module-consistent shapes.  AIR calls this per-object per-timestep;
    # we collapse (timesteps, batch) into one M dimension before the kernel.
    z_what_dim = 32
    decoder_hidden_dim = 64
    object_size = 8
    color_channels = 3
    timesteps, batch = 5, 8
    object_numel = color_channels * object_size ** 2  # 192

    key = jax.random.PRNGKey(0)
    k_z, k_w1, k_b1, k_w2, k_b2 = jax.random.split(key, 5)

    z_what = jax.random.normal(k_z, (timesteps, batch, z_what_dim),
                               dtype=jnp.float32)
    # PyTorch Linear stores W as (out, in); we materialize the transposed
    # (in, out) layout used by the kernel.
    w1 = 0.1 * jax.random.normal(k_w1, (z_what_dim, decoder_hidden_dim),
                                 dtype=jnp.float32)
    b1 = 0.1 * jax.random.normal(k_b1, (decoder_hidden_dim,), dtype=jnp.float32)
    w2 = 0.1 * jax.random.normal(k_w2, (decoder_hidden_dim, object_numel),
                                 dtype=jnp.float32)
    b2 = 0.1 * jax.random.normal(k_b2, (object_numel,), dtype=jnp.float32)

    ref = _reference(z_what, w1, b1, w2, b2, object_size, color_channels,
                     bias=-2.0)

    # f32 path (default): tight tolerance.  M=40 with TM=16 -> 3 grid steps,
    # last one ragged (exercises the masked partial write).
    decode_f32 = make_appearance_decoder(
        w1, b1, w2, b2, object_size=object_size,
        color_channels=color_channels, bias=-2.0)
    out = jax.block_until_ready(decode_f32(z_what))
    assert out.shape == (timesteps * batch, color_channels, object_size,
                         object_size)
    assert jnp.allclose(out, ref, atol=1e-5, rtol=1e-5), "f32 mismatch vs ref"

    # bf16-output path (halves the dominant output HBM traffic): looser tol.
    decode_bf16 = make_appearance_decoder(
        w1, b1, w2, b2, object_size=object_size,
        color_channels=color_channels, bias=-2.0, out_dtype=jnp.bfloat16)
    out_bf16 = jax.block_until_ready(decode_bf16(z_what))
    assert out_bf16.shape == out.shape
    assert out_bf16.dtype == jnp.bfloat16
    assert jnp.allclose(out_bf16.astype(jnp.float32), ref,
                        atol=2e-2), "bf16-out mismatch vs ref"

    print("KERNEL_OK")
</pallas_src>

<mosaic_0001>
module attributes {stable_mosaic.version = 11 : i64} {
  func.func @_decoder_kernel(%arg0: i32, %arg1: memref<16x32xf32, #tpu.memory_space<vmem>>, %arg2: memref<32x64xf32, #tpu.memory_space<vmem>>, %arg3: memref<1x64xf32, #tpu.memory_space<vmem>>, %arg4: memref<64x192xf32, #tpu.memory_space<vmem>>, %arg5: memref<1x192xf32, #tpu.memory_space<vmem>>, %arg6: memref<16x192xf32, #tpu.memory_space<vmem>>) attributes {dimension_semantics = [#tpu.dimension_semantics<parallel>], iteration_bounds = array<i64: 3>, scalar_prefetch = 0 : i64, scratch_operands = 0 : i64, tpu.core_type = #tpu.core_type<tc>, window_params = [{transform_indices = @transform_0, window_bounds = array<i64: 16, 32>}, {pipeline_mode = #tpu.pipeline_mode<synchronous>, transform_indices = @transform_1, window_bounds = array<i64: 32, 64>}, {pipeline_mode = #tpu.pipeline_mode<synchronous>, transform_indices = @transform_2, window_bounds = array<i64: 1, 64>}, {pipeline_mode = #tpu.pipeline_mode<synchronous>, transform_indices = @transform_3, window_bounds = array<i64: 64, 192>}, {pipeline_mode = #tpu.pipeline_mode<synchronous>, transform_indices = @transform_4, window_bounds = array<i64: 1, 192>}, {transform_indices = @transform_5, window_bounds = array<i64: 16, 192>}]} {
    %c0 = arith.constant 0 : index
    %c0_0 = arith.constant 0 : index
    %0 = vector.load %arg1[%c0, %c0_0] : memref<16x32xf32, #tpu.memory_space<vmem>>, vector<16x32xf32>
    %c0_1 = arith.constant 0 : index
    %c0_2 = arith.constant 0 : index
    %1 = vector.load %arg2[%c0_1, %c0_2] : memref<32x64xf32, #tpu.memory_space<vmem>>, vector<32x64xf32>
    %cst = arith.constant dense<0.000000e+00> : vector<16x64xf32>
    %2 = tpu.matmul %0, %1, %cst {dimension_numbers = #tpu.dot_dimension_numbers<[1], [0], [0], [1], [0, 0, 1, 1], [], []>} : vector<16x32xf32>, vector<32x64xf32>, vector<16x64xf32> -> vector<16x64xf32>
    %c0_3 = arith.constant 0 : index
    %c0_4 = arith.constant 0 : index
    %3 = vector.load %arg3[%c0_3, %c0_4] : memref<1x64xf32, #tpu.memory_space<vmem>>, vector<1x64xf32>
    %4 = vector.broadcast %3 : vector<1x64xf32> to vector<16x64xf32>
    %5 = arith.addf %2, %4 : vector<16x64xf32>
    %cst_5 = arith.constant 0.000000e+00 : f32
    %6 = vector.broadcast %cst_5 : f32 to vector<16x64xf32>
    %7 = arith.maximumf %5, %6 : vector<16x64xf32>
    %c0_6 = arith.constant 0 : index
    %c0_7 = arith.constant 0 : index
    %8 = vector.load %arg4[%c0_6, %c0_7] : memref<64x192xf32, #tpu.memory_space<vmem>>, vector<64x192xf32>
    %cst_8 = arith.constant dense<0.000000e+00> : vector<16x192xf32>
    %9 = tpu.matmul %7, %8, %cst_8 {dimension_numbers = #tpu.dot_dimension_numbers<[1], [0], [0], [1], [0, 0, 1, 1], [], []>} : vector<16x64xf32>, vector<64x192xf32>, vector<16x192xf32> -> vector<16x192xf32>
    %c0_9 = arith.constant 0 : index
    %c0_10 = arith.constant 0 : index
    %10 = vector.load %arg5[%c0_9, %c0_10] : memref<1x192xf32, #tpu.memory_space<vmem>>, vector<1x192xf32>
    %11 = vector.broadcast %10 : vector<1x192xf32> to vector<16x192xf32>
    %12 = arith.addf %9, %11 : vector<16x192xf32>
    %13 = arith.negf %12 : vector<16x192xf32>
    %14 = math.exp %13 : vector<16x192xf32>
    %cst_11 = arith.constant 1.000000e+00 : f32
    %15 = vector.broadcast %cst_11 : f32 to vector<16x192xf32>
    %16 = arith.addf %15, %14 : vector<16x192xf32>
    %17 = arith.divf %15, %16 : vector<16x192xf32>
    %c0_12 = arith.constant 0 : index
    %c0_13 = arith.constant 0 : index
    %18 = vector.load %arg6[%c0_12, %c0_13] : memref<16x192xf32, #tpu.memory_space<vmem>>, vector<16x192xf32>
    tpu.vector_store %arg6[%c0_12, %c0_13], %17 {strides = array<i32>} : memref<16x192xf32, #tpu.memory_space<vmem>>, vector<16x192xf32>,
    return
  }
  func.func @transform_0(%arg0: i32) -> (i32, i32) {
    %c0_i32 = arith.constant 0 : i32
    %c0_i32_0 = arith.constant 0 : i32
    return %arg0, %c0_i32 : i32, i32
  }
  func.func @transform_1(%arg0: i32) -> (i32, i32) {
    %c0_i32 = arith.constant 0 : i32
    %c0_i32_0 = arith.constant 0 : i32
    %c0_i32_1 = arith.constant 0 : i32
    return %c0_i32, %c0_i32_0 : i32, i32
  }
  func.func @transform_2(%arg0: i32) -> (i32, i32) {
    %c0_i32 = arith.constant 0 : i32
    %c0_i32_0 = arith.constant 0 : i32
    %c0_i32_1 = arith.constant 0 : i32
    return %c0_i32, %c0_i32_0 : i32, i32
  }
  func.func @transform_3(%arg0: i32) -> (i32, i32) {
    %c0_i32 = arith.constant 0 : i32
    %c0_i32_0 = arith.constant 0 : i32
    %c0_i32_1 = arith.constant 0 : i32
    return %c0_i32, %c0_i32_0 : i32, i32
  }
  func.func @transform_4(%arg0: i32) -> (i32, i32) {
    %c0_i32 = arith.constant 0 : i32
    %c0_i32_0 = arith.constant 0 : i32
    %c0_i32_1 = arith.constant 0 : i32
    return %c0_i32, %c0_i32_0 : i32, i32
  }
  func.func @transform_5(%arg0: i32) -> (i32, i32) {
    %c0_i32 = arith.constant 0 : i32
    %c0_i32_0 = arith.constant 0 : i32
    return %arg0, %c0_i32 : i32, i32
  }
}

</mosaic_0001>

<llo_original>
// kernel: decoder.1
$region0: #{decoder.1}
  #allocation0 [shape = 'u32[]', space=smem, size = 0x4, offset = 0x4, fixed_abs, tag = 'smem constant byte address 0x4 - core index']
  #allocation1 [shape = 'u32[144,128]{1,0:T(1,128)}', space=vmem, size = 0x12000, scoped, tag = 'internal scratch']
  %s0 = inlined_call_operand.hbm [shape: f32[40,32], index: 0, kind: input, shape index: {}]
  %s1 = inlined_call_operand.hbm [shape: f32[32,64], index: 1, kind: input, shape index: {}]
  %s2 = inlined_call_operand.vmem [shape: f32[1,64], index: 2, kind: input, shape index: {}]
  %s3 = inlined_call_operand.hbm [shape: f32[64,192], index: 3, kind: input, shape index: {}]
  %s4 = inlined_call_operand.vmem [shape: f32[1,192], index: 4, kind: input, shape index: {}]
  %s5 = inlined_call_operand.vmem [shape: f32[40,192], index: 5, kind: output, shape index: {}]
  %s6 = sld [smem:[#allocation0]]
  $region91: #{decoder.1} parent=0
    _
  %s8 = ssub.s32 1, %s6
  %s9 = scalar_select 0, %s8, %s6
  $region1: #{decoder.1} parent=0
    #allocation2 [shape = 'u8[16384]{0}', space=vmem, size = 0x4000, scoped, tag = 'input window, operand 0']
    #allocation3 [shape = 's32[2]{0}', space=sflag, size = 0x8, scoped, tag = 'scoped memory for decoder.1']
    #allocation4 [shape = 'u8[16384]{0}', space=vmem, size = 0x4000, scoped, tag = 'input window, operand 1, single buffered']
    #allocation5 [shape = 's32[1]{0}', space=sflag, size = 0x4, scoped, tag = 'scoped memory for decoder.1']
    #allocation6 [shape = 'u8[65536]{0}', space=vmem, size = 0x10000, scoped, tag = 'input window, operand 3, single buffered']
    #allocation7 [shape = 'u8[32768]{0}', space=vmem, size = 0x8000, scoped, tag = 'output window, operand 0']
    %10 = vsyncpa [#allocation3], 0
    %s11 = scalar_lea.sflag [#allocation3], 1
    %12 = vsyncpa %s11, 0
    %13 = vsyncpa [#allocation5], 0
    loop: start=0, step=1, limit=5
    $region2: #{decoder.1} parent=1 // loop_pre_header
      _
    $region3: #{decoder.1} parent=1 // loop_header
      %s15 = sphi 0, %s19
      %p16 = scmp.ge.s32.totalorder %s15, 5
      %s25 = sphi 0, %s27
      %s28 = sphi 0, %s25
      %s29 = sphi 0, %s28
      %s45 = sphi 0, %s29
      %s49 = sphi 0, %s49
      %s51 = sphi 0, %s49
      %s52 = sphi 0, %s51
      %s66 = sphi 0, %s52
      %s70 = sphi 0, %s70
      %s72 = sphi 0, %s70
      %s73 = sphi 0, %s72
      %s87 = sphi 0, %s73
      %s91 = sphi 0, %s91
      %s93 = sphi 0, %s91
      %s94 = sphi 0, %s93
      %s108 = sphi 0, %s94
      %s112 = sphi 0, %s112
      %s114 = sphi 0, %s112
      %s115 = sphi 0, %s114
      %s129 = sphi 0, %s115
      %s135 = sphi 0, %s137
      %s138 = sphi 0, %s135
      %s139 = sphi 0, %s138
      %s155 = sphi 0, %s139
    $region4: #{decoder.1} parent=1 // loop_header_branch
      %18 = sbr.rel (%p16) target = $region8
    $region5: #{decoder.1} parent=1 // loop_body
      %s20 = ssub.s32 %s15, 1
      %s21 = ssub.s32 %s15, 2
      %s22 = sadd.s32 %s15, 1
      %s23 = ssub.s32 %s15, %s22
      %p24 = scmp.eq.s32.totalorder %s23, 0
      %s26 = sadd.s32 %s25, 1
      %s27 = scalar_select %p24, %s25, %s26
      %p30 = pneg %p24
      %p31 = scmp.eq.s32.totalorder %s15, 2
      %p32 = por %p30, %p31
      %p33 = scmp.ne.s32.totalorder %s25, %s28
      %p34 = scmp.eq.s32.totalorder %s15, 0
      %p35 = por %p33, %p34
      %p36 = scmp.ne.s32.totalorder %s25, %s28
      %p37 = scmp.eq.s32.totalorder %s20, 2
      %p38 = por %p36, %p37
      %p39 = scmp.ne.s32.totalorder %s28, %s29
      %p40 = scmp.eq.s32.totalorder %s20, 0
      %p41 = por %p39, %p40
      %p42 = scmp.ne.s32.totalorder %s28, %s29
      %p43 = scmp.eq.s32.totalorder %s21, 2
      %p44 = por %p42, %p43
      %p46 = scmp.ne.s32.totalorder %s29, %s45
      %p47 = scmp.eq.s32.totalorder %s21, 0
      %p48 = por %p46, %p47
      %s50 = sadd.s32 %s49, 1
      %p53 = scmp.eq.s32.totalorder %s15, 2
      %p54 = scmp.ne.s32.totalorder %s49, %s51
      %p55 = scmp.eq.s32.totalorder %s15, 0
      %p56 = por %p54, %p55
      %p57 = scmp.ne.s32.totalorder %s49, %s51
      %p58 = scmp.eq.s32.totalorder %s20, 2
      %p59 = por %p57, %p58
      %p60 = scmp.ne.s32.totalorder %s51, %s52
      %p61 = scmp.eq.s32.totalorder %s20, 0
      %p62 = por %p60, %p61
      %p63 = scmp.ne.s32.totalorder %s51, %s52
      %p64 = scmp.eq.s32.totalorder %s21, 2
      %p65 = por %p63, %p64
      %p67 = scmp.ne.s32.totalorder %s52, %s66
      %p68 = scmp.eq.s32.totalorder %s21, 0
      %p69 = por %p67, %p68
      %s71 = sadd.s32 %s70, 1
      %p74 = scmp.eq.s32.totalorder %s15, 2
      %p75 = scmp.ne.s32.totalorder %s70, %s72
      %p76 = scmp.eq.s32.totalorder %s15, 0
      %p77 = por %p75, %p76
      %p78 = scmp.ne.s32.totalorder %s70, %s72
      %p79 = scmp.eq.s32.totalorder %s20, 2
      %p80 = por %p78, %p79
      %p81 = scmp.ne.s32.totalorder %s72, %s73
      %p82 = scmp.eq.s32.totalorder %s20, 0
      %p83 = por %p81, %p82
      %p84 = scmp.ne.s32.totalorder %s72, %s73
      %p85 = scmp.eq.s32.totalorder %s21, 2
      %p86 = por %p84, %p85
      %p88 = scmp.ne.s32.totalorder %s73, %s87
      %p89 = scmp.eq.s32.totalorder %s21, 0
      %p90 = por %p88, %p89
      %s92 = sadd.s32 %s91, 1
      %p95 = scmp.eq.s32.totalorder %s15, 2
      %p96 = scmp.ne.s32.totalorder %s91, %s93
      %p97 = scmp.eq.s32.totalorder %s15, 0
      %p98 = por %p96, %p97
      %p99 = scmp.ne.s32.totalorder %s91, %s93
      %p100 = scmp.eq.s32.totalorder %s20, 2
      %p101 = por %p99, %p100
      %p102 = scmp.ne.s32.totalorder %s93, %s94
      %p103 = scmp.eq.s32.totalorder %s20, 0
      %p104 = por %p102, %p103
      %p105 = scmp.ne.s32.totalorder %s93, %s94
      %p106 = scmp.eq.s32.totalorder %s21, 2
      %p107 = por %p105, %p106
      %p109 = scmp.ne.s32.totalorder %s94, %s108
      %p110 = scmp.eq.s32.totalorder %s21, 0
      %p111 = por %p109, %p110
      %s113 = sadd.s32 %s112, 1
      %p116 = scmp.eq.s32.totalorder %s15, 2
      %p117 = scmp.ne.s32.totalorder %s112, %s114
      %p118 = scmp.eq.s32.totalorder %s15, 0
      %p119 = por %p117, %p118
      %p120 = scmp.ne.s32.totalorder %s112, %s114
      %p121 = scmp.eq.s32.totalorder %s20, 2
      %p122 = por %p120, %p121
      %p123 = scmp.ne.s32.totalorder %s114, %s115
      %p124 = scmp.eq.s32.totalorder %s20, 0
      %p125 = por %p123, %p124
      %p126 = scmp.ne.s32.totalorder %s114, %s115
      %p127 = scmp.eq.s32.totalorder %s21, 2
      %p128 = por %p126, %p127
      %p130 = scmp.ne.s32.totalorder %s115, %s129
      %p131 = scmp.eq.s32.totalorder %s21, 0
      %p132 = por %p130, %p131
      %s133 = ssub.s32 %s15, %s22
      %p134 = scmp.eq.s32.totalorder %s133, 0
      %s136 = sadd.s32 %s135, 1
      %s137 = scalar_select %p134, %s135, %s136
      %p140 = pneg %p134
      %p141 = scmp.eq.s32.totalorder %s15, 2
      %p142 = por %p140, %p141
      %p143 = scmp.ne.s32.totalorder %s135, %s138
      %p144 = scmp.eq.s32.totalorder %s15, 0
      %p145 = por %p143, %p144
      %p146 = scmp.ne.s32.totalorder %s135, %s138
      %p147 = scmp.eq.s32.totalorder %s20, 2
      %p148 = por %p146, %p147
      %p149 = scmp.ne.s32.totalorder %s138, %s139
      %p150 = scmp.eq.s32.totalorder %s20, 0
      %p151 = por %p149, %p150
      %p152 = scmp.ne.s32.totalorder %s138, %s139
      %p153 = scmp.eq.s32.totalorder %s21, 2
      %p154 = por %p152, %p153
      %p156 = scmp.ne.s32.totalorder %s139, %s155
      %p157 = scmp.eq.s32.totalorder %s21, 0
      %p158 = por %p156, %p157
      %p159 = scmp.le.s32.totalorder 1, %s15
      %p160 = scmp.lt.s32.totalorder %s15, 4
      %p161 = pnand %p159, %p160
      %p162 = pneg %p161
      // Predicated region
      $region9: #{decoder.1} parent=5 // pred_check
        _
      $region10: #{decoder.1} parent=5 // pred_check_branch
        %164 = sbr.rel (%p161) target = $region12
      $region11: #{decoder.1} parent=5 // pred_region
        %s165 = ssub.s32 %s15, 1
        // Predicated region
        $region13: #{decoder.1} parent=11 // pred_check
          %p166 = pneg %p62
        $region14: #{decoder.1} parent=11 // pred_check_branch
          %168 = sbr.rel (%p166) target = $region16
        $region15: #{decoder.1} parent=11 // pred_region
          %s170 = ssub.s32 512, 512
          %171 = vsyncadd [#allocation5], %s170
          %s172 = sshll.u32 [#allocation4], 4
          %s173 = int_to_ptr.vmem [resolvable:$true] %s172
          %178 = dma.hbm_to_vmem [thread:$0]  %s1, 512, %s173, [#allocation5], 128, 128, 8
        $region16: #{decoder.1} parent=11 // pred_fallthru
          _
        // Predicated region
        $region17: #{decoder.1} parent=11 // pred_check
          %p179 = pneg %p83
        $region18: #{decoder.1} parent=11 // pred_check_branch
          %181 = sbr.rel (%p179) target = $region20
        $region19: #{decoder.1} parent=11 // pred_region
          _
        $region20: #{decoder.1} parent=11 // pred_fallthru
          _
        // Predicated region
        $region21: #{decoder.1} parent=11 // pred_check
          %p182 = pneg %p104
        $region22: #{decoder.1} parent=11 // pred_check_branch
          %184 = sbr.rel (%p182) target = $region24
        $region23: #{decoder.1} parent=11 // pred_region
          %s186 = ssub.s32 2048, 2048
          %187 = vsyncadd [#allocation5], %s186
          %s188 = sshll.u32 [#allocation6], 4
          %s189 = int_to_ptr.vmem [resolvable:$true] %s188
          %194 = dma.hbm_to_vmem [thread:$0]  %s3, 2048, %s189, [#allocation5], 256, 256, 16
        $region24: #{decoder.1} parent=11 // pred_fallthru
          _
        // Predicated region
        $region25: #{decoder.1} parent=11 // pred_check
          %p195 = pneg %p125
        $region26: #{decoder.1} parent=11 // pred_check_branch
          %197 = sbr.rel (%p195) target = $region28
        $region27: #{decoder.1} parent=11 // pred_region
          _
        $region28: #{decoder.1} parent=11 // pred_fallthru
          _
      $region12: #{decoder.1} parent=5 // pred_fallthru
        _
      %p198 = scmp.lt.s32.totalorder %s15, 3
      // Predicated region
      $region29: #{decoder.1} parent=5 // pred_check
        %p199 = pneg %p198
      $region30: #{decoder.1} parent=5 // pred_check_branch
        %201 = sbr.rel (%p199) target = $region32
      $region31: #{decoder.1} parent=5 // pred_region
        // Predicated region
        $region33: #{decoder.1} parent=31 // pred_check
          %p202 = pneg %p35
        $region34: #{decoder.1} parent=31 // pred_check_branch
          %204 = sbr.rel (%p202) target = $region36
        $region35: #{decoder.1} parent=31 // pred_region
          %s205 = sand.u32 %s25, 1
          %s206 = scalar_lea.sflag [#allocation3], %s205
          %s207 = sand.u32 %s25, 1
          %s208 = smul.addr %s207, 16
          %s209 = scalar_lea.vmem [#allocation2], %s208
          %s210 = smul.u32 2, %s15
          %s211 = ssub.s32 5, %s210
          %p212 = scmp.lt.s32.totalorder %s211, 2
          %s213 = scalar_select %p212, %s211, 2
          %s214 = smul.u32 128, %s213
          %s216 = ssub.s32 256, %s214
          %217 = vsyncadd %s206, %s216
          %p218 = scmp.ne.s32.totalorder 0, %s214
          %s219 = smul.addr %s210, 128
          %s220 = scalar_lea.hbm %s0, %s219
          %s221 = smul.u32 8, %s213
          %s222 = sshll.u32 %s209, 4
          %s223 = int_to_ptr.vmem [resolvable:$true] %s222
          %s224 = sshll.u32 %s221, 4
          %228 = dma.hbm_to_vmem [thread:$0]  (%p218), %s220, %s224, %s223, %s206, 128, 128, 8
        $region36: #{decoder.1} parent=31 // pred_fallthru
          _
      $region32: #{decoder.1} parent=5 // pred_fallthru
        _
      %p229 = scmp.le.s32.totalorder 1, %s15
      %p230 = scmp.lt.s32.totalorder %s15, 4
      %p231 = pnand %p229, %p230
      %p232 = pneg %p231
      // Predicated region
      $region37: #{decoder.1} parent=5 // pred_check
        _
      $region38: #{decoder.1} parent=5 // pred_check_branch
        %234 = sbr.rel (%p231) target = $region40
      $region39: #{decoder.1} parent=5 // pred_region
        %s235 = ssub.s32 %s15, 1
        %s236 = sand.u32 %s28, 1
        %s237 = scalar_lea.sflag [#allocation3], %s236
        %s238 = sand.u32 %s28, 1
        %s239 = smul.addr %s238, 16
        %s240 = scalar_lea.vmem [#allocation2], %s239
        // Predicated region
        $region41: #{decoder.1} parent=39 // pred_check
          %p241 = pneg %p41
        $region42: #{decoder.1} parent=39 // pred_check_branch
          %243 = sbr.rel (%p241) target = $region44
        $region43: #{decoder.1} parent=39 // pred_region
          %244 = dma.done %s237, 256
        $region44: #{decoder.1} parent=39 // pred_fallthru
          _
        // Predicated region
        $region45: #{decoder.1} parent=39 // pred_check
          %p245 = pneg %p62
        $region46: #{decoder.1} parent=39 // pred_check_branch
          %247 = sbr.rel (%p245) target = $region48
        $region47: #{decoder.1} parent=39 // pred_region
          %248 = dma.done [#allocation5], 512
        $region48: #{decoder.1} parent=39 // pred_fallthru
          _
        // Predicated region
        $region49: #{decoder.1} parent=39 // pred_check
          %p249 = pneg %p104
        $region50: #{decoder.1} parent=39 // pred_check_branch
          %251 = sbr.rel (%p249) target = $region52
        $region51: #{decoder.1} parent=39 // pred_region
          %252 = dma.done [#allocation5], 2048
        $region52: #{decoder.1} parent=39 // pred_fallthru
          _
        %s253 = sand.u32 %s28, 1
        %s254 = scalar_lea.sflag [#allocation3], %s253
        %s255 = sand.u32 %s28, 1
        %s256 = smul.addr %s255, 16
        %s257 = scalar_lea.vmem [#allocation2], %s256
        %p258 = pneg %p41
        %p259 = pneg %p38
        %p260 = pneg %p62
        %p261 = pneg %p59
        %p262 = pneg %p83
        %p263 = pneg %p80
        %p264 = pneg %p104
        %p265 = pneg %p101
        %p266 = pneg %p125
        %p267 = pneg %p122
        %p268 = pneg %p151
        %p269 = pneg %p148
        %s270 = sand.u32 %s138, 1
        %s271 = sand.u32 %s138, 1
        %s272 = smul.addr %s271, 32
        %s273 = scalar_lea.vmem [#allocation7], %s272
        %s274 = smul.u32 2, %s20
        %s275 = ssub.s32 5, %s274
        %p276 = scmp.lt.s32.totalorder %s275, 2
        %s277 = scalar_select %p276, %s275, 2
        %s278 = smul.u32 128, %s277
        %s279 = smul.u32 2, %s20
        %s280 = ssub.s32 5, %s279
        %p281 = scmp.lt.s32.totalorder %s280, 2
        %s282 = scalar_select %p281, %s280, 2
        %s283 = smul.u32 128, %s282
        %s284 = smul.u32 %s283, 2
        %v285 = vld [vmem:[%s240] sm:$0xff]
        %v286 = vld [vmem:[%s240 + $0x8] sm:$0xff]
        %v287 = vld [vmem:[#allocation4] sm:$0xff]
        %v288 = vld [vmem:[#allocation4 + $0x8] sm:$0xff]
        %v289 = vld [vmem:[#allocation4 + $0x10] sm:$0xff]
        %v290 = vld [vmem:[#allocation4 + $0x18] sm:$0xff]
        %v291 = vld [vmem:[%s2] sm:$0x1]
        %v293 = vlaneseq
        %v294 = vshrl.u32 %v293, 7
        %v295 = vsub.s32 0, %v294
        %v296 = vrot.slane %v291, %v295
        %vm298 = vcmask 261120
        %v300 = vsel %vm298, %v285, 0
        %v303 = vsel %vm298, %v286, 0
        %305 = vmatprep.subr.mxu0 0.0
        %306 = vmatpush1.msra.mxu0 %v287
        %307 = vmatprep.subr.mxu0 0.0
        %308 = vmatpush1.msra.mxu0 %v288
        %309 = vmatprep.subr.mxu0 0.0
        %310 = vmatpush1.msra.mxu0 %v289
        %311 = vmatprep.subr.mxu0 0.0
        %312 = vmatpush1.msra.mxu0 %v290
        %313 = vmatprep.subr.mxu0 0.0
        %314 = vmatpush1.msra.mxu0 0.0
        %315 = vmatprep.subr.mxu0 0.0
        %316 = vmatpush1.msra.mxu0 0.0
        %317 = vmatprep.subr.mxu0 0.0
        %318 = vmatpush1.msra.mxu0 0.0
        %319 = vmatprep.subr.mxu0 0.0
        %320 = vmatpush1.msra.mxu0 0.0
        %321 = vmatprep.subr.mxu0 0.0
        %322 = vmatpush1.msra.mxu0 0.0
        %323 = vmatprep.subr.mxu0 0.0
        %324 = vmatpush1.msra.mxu0 0.0
        %325 = vmatprep.subr.mxu0 0.0
        %326 = vmatpush1.msra.mxu0 0.0
        %327 = vmatprep.subr.mxu0 0.0
        %328 = vmatpush1.msra.mxu0 0.0
        %329 = vmatprep.subr.mxu0 0.0
        %330 = vmatpush1.msra.mxu0 0.0
        %331 = vmatprep.subr.mxu0 0.0
        %332 = vmatpush1.msra.mxu0 0.0
        %333 = vmatprep.subr.mxu0 0.0
        %334 = vmatpush1.msra.mxu0 0.0
        %335 = vmatprep.subr.mxu0 0.0
        %336 = vmatpush1.msra.mxu0 0.0
        %337 = vmatprep.subr.mxu0 0.0
        %338 = vmatpush1.msra.mxu0 0.0
        %339 = vmatprep.subr.mxu0 0.0
        %340 = vmatpush1.msra.mxu0 0.0
        %341 = vmatprep.subr.mxu0 0.0
        %342 = vmatpush1.msra.mxu0 0.0
        %343 = vmatprep.subr.mxu0 0.0
        %344 = vmatpush1.msra.mxu0 0.0
        %345 = vmatprep.subr.mxu0 0.0
        %346 = vmatpush1.msra.mxu0 0.0
        %347 = vmatprep.subr.mxu0 0.0
        %348 = vmatpush1.msra.mxu0 0.0
        %349 = vmatprep.subr.mxu0 0.0
        %350 = vmatpush1.msra.mxu0 0.0
        %351 = vmatprep.subr.mxu0 0.0
        %352 = vmatpush1.msra.mxu0 0.0
        %353 = vmatprep.subr.mxu0 0.0
        %354 = vmatpush1.msra.mxu0 0.0
        %355 = vmatprep.subr.mxu0 0.0
        %356 = vmatpush1.msra.mxu0 0.0
        %357 = vmatprep.subr.mxu0 0.0
        %358 = vmatpush1.msra.mxu0 0.0
        %359 = vmatprep.subr.mxu0 0.0
        %360 = vmatpush1.msra.mxu0 0.0
        %361 = vmatprep.subr.mxu0 0.0
        %362 = vmatpush1.msra.mxu0 0.0
        %363 = vmatprep.subr.mxu0 0.0
        %364 = vmatpush1.msra.mxu0 0.0
        %365 = vmatprep.subr.mxu0 0.0
        %366 = vmatpush1.msra.mxu0 0.0
        %367 = vmatprep.subr.mxu0 0.0
        %368 = vmatpush1.msra.mxu0 0.0
        %369 = vmatprep.mubr.f32.mxu0 0.0
        %370 = vmatmul.mubr.f32.gmra.mrb[0].mxu0 %v300
        %v371 = vpop.f32.mrb[0].mxu0
        %v372 = vadd.f32 %v296, %v371
        %v373 = vpop.f32.mrb[0].mxu0
        %374 = vmatprep.mubr.f32.mxu0 0.0
        %375 = vmatmul.mubr.f32.gmra.mrb[0].mxu0 %v303
        %v376 = vpop.f32.mrb[0].mxu0
        %v377 = vadd.f32 %v296, %v376
        %v378 = vpop.f32.mrb[0].mxu0
        %379 = vdwg.mxu0
        %v380 = vmax.f32 %v372, 0.0
        %v381 = vmax.f32 %v377, 0.0
        %v382 = vld [vmem:[#allocation6] sm:$0xff]
        %v383 = vld [vmem:[#allocation6 + $0x8] sm:$0xff]
        %v384 = vld [vmem:[#allocation6 + $0x10] sm:$0xff]
        %v385 = vld [vmem:[#allocation6 + $0x18] sm:$0xff]
        %v386 = vld [vmem:[#allocation6 + $0x20] sm:$0xff]
        %v387 = vld [vmem:[#allocation6 + $0x28] sm:$0xff]
        %v388 = vld [vmem:[#allocation6 + $0x30] sm:$0xff]
        %v389 = vld [vmem:[#allocation6 + $0x38] sm:$0xff]
        %v390 = vld [vmem:[#allocation6 + $0x40] sm:$0xff]
        %v391 = vld [vmem:[#allocation6 + $0x48] sm:$0xff]
        %v392 = vld [vmem:[#allocation6 + $0x50] sm:$0xff]
        %v393 = vld [vmem:[#allocation6 + $0x58] sm:$0xff]
        %v394 = vld [vmem:[#allocation6 + $0x60] sm:$0xff]
        %v395 = vld [vmem:[#allocation6 + $0x68] sm:$0xff]
        %v396 = vld [vmem:[#allocation6 + $0x70] sm:$0xff]
        %v397 = vld [vmem:[#allocation6 + $0x78] sm:$0xff]
        %v398 = vld [vmem:[%s4] sm:$0x3]
        %v400 = vlaneseq
        %v401 = vshrl.u32 %v400, 7
        %v402 = vsub.s32 0, %v401
        %v403 = vrot.slane %v398, %v402
        %v404 = vlaneseq
        %v405 = vshrl.u32 %v404, 7
        %v406 = vsub.s32 1, %v405
        %v407 = vrot.slane %v398, %v406
        %vm410 = vcmask 523264
        %v412 = vsel %vm410, %v380, 0
        %v415 = vsel %vm410, %v381, 0
        %417 = vmatprep.subr.mxu0 %v383
        %418 = vmatpush1.msra.mxu0 %v382
        %419 = vmatprep.subr.mxu0 %v385
        %420 = vmatpush1.msra.mxu0 %v384
        %421 = vmatprep.subr.mxu0 %v387
        %422 = vmatpush1.msra.mxu0 %v386
        %423 = vmatprep.subr.mxu0 %v389
        %424 = vmatpush1.msra.mxu0 %v388
        %425 = vmatprep.subr.mxu0 %v391
        %426 = vmatpush1.msra.mxu0 %v390
        %427 = vmatprep.subr.mxu0 %v393
        %428 = vmatpush1.msra.mxu0 %v392
        %429 = vmatprep.subr.mxu0 %v395
        %430 = vmatpush1.msra.mxu0 %v394
        %431 = vmatprep.subr.mxu0 %v397
        %432 = vmatpush1.msra.mxu0 %v396
        %433 = vmatprep.subr.mxu0 0.0
        %434 = vmatpush1.msra.mxu0 0.0
        %435 = vmatprep.subr.mxu0 0.0
        %436 = vmatpush1.msra.mxu0 0.0
        %437 = vmatprep.subr.mxu0 0.0
        %438 = vmatpush1.msra.mxu0 0.0
        %439 = vmatprep.subr.mxu0 0.0
        %440 = vmatpush1.msra.mxu0 0.0
        %441 = vmatprep.subr.mxu0 0.0
        %442 = vmatpush1.msra.mxu0 0.0
        %443 = vmatprep.subr.mxu0 0.0
        %444 = vmatpush1.msra.mxu0 0.0
        %445 = vmatprep.subr.mxu0 0.0
        %446 = vmatpush1.msra.mxu0 0.0
        %447 = vmatprep.subr.mxu0 0.0
        %448 = vmatpush1.msra.mxu0 0.0
        %449 = vmatprep.subr.mxu0 0.0
        %450 = vmatpush1.msra.mxu0 0.0
        %451 = vmatprep.subr.mxu0 0.0
        %452 = vmatpush1.msra.mxu0 0.0
        %453 = vmatprep.subr.mxu0 0.0
        %454 = vmatpush1.msra.mxu0 0.0
        %455 = vmatprep.subr.mxu0 0.0
        %456 = vmatpush1.msra.mxu0 0.0
        %457 = vmatprep.subr.mxu0 0.0
        %458 = vmatpush1.msra.mxu0 0.0
        %459 = vmatprep.subr.mxu0 0.0
        %460 = vmatpush1.msra.mxu0 0.0
        %461 = vmatprep.subr.mxu0 0.0
        %462 = vmatpush1.msra.mxu0 0.0
        %463 = vmatprep.subr.mxu0 0.0
        %464 = vmatpush1.msra.mxu0 0.0
        %465 = vmatprep.subr.mxu0 0.0
        %466 = vmatpush1.msra.mxu0 0.0
        %467 = vmatprep.subr.mxu0 0.0
        %468 = vmatpush1.msra.mxu0 0.0
        %469 = vmatprep.subr.mxu0 0.0
        %470 = vmatpush1.msra.mxu0 0.0
        %471 = vmatprep.subr.mxu0 0.0
        %472 = vmatpush1.msra.mxu0 0.0
        %473 = vmatprep.subr.mxu0 0.0
        %474 = vmatpush1.msra.mxu0 0.0
        %475 = vmatprep.subr.mxu0 0.0
        %476 = vmatpush1.msra.mxu0 0.0
        %477 = vmatprep.subr.mxu0 0.0
        %478 = vmatpush1.msra.mxu0 0.0
        %479 = vmatprep.subr.mxu0 0.0
        %480 = vmatpush1.msra.mxu0 0.0
        %481 = vmatprep.mubr.f32.mxu0 0.0
        %482 = vmatmul.mubr.f32.gmra.mrb[0].mxu0 %v412
        %v483 = vpop.f32.mrb[0].mxu0
        %v484 = vadd.f32 %v403, %v483
        %v485 = vpop.f32.mrb[0].mxu0
        %v486 = vadd.f32 %v407, %v485
        %487 = vmatprep.mubr.f32.mxu0 0.0
        %488 = vmatmul.mubr.f32.gmra.mrb[0].mxu0 %v415
        %v489 = vpop.f32.mrb[0].mxu0
        %v490 = vadd.f32 %v403, %v489
        %v491 = vpop.f32.mrb[0].mxu0
        %v492 = vadd.f32 %v407, %v491
        %493 = vdwg.mxu0
        %v494 = vxor.u32 %v484, 2147483648
        %v495 = vxor.u32 %v486, 2147483648
        %v496 = vxor.u32 %v490, 2147483648
        %v497 = vxor.u32 %v492, 2147483648
        %v498 = vmul.f32 %v494, 1.442695
        %v499 = vpow.pop %v498
        %v500 = vmul.f32 %v495, 1.442695
        %v501 = vpow.pop %v500
        %v502 = vmul.f32 %v496, 1.442695
        %v503 = vpow.pop %v502
        %v504 = vmul.f32 %v497, 1.442695
        %v505 = vpow.pop %v504
        %v506 = vadd.f32 %v499, 1.0
        %v507 = vadd.f32 %v501, 1.0
        %v508 = vadd.f32 %v503, 1.0
        %v509 = vadd.f32 %v505, 1.0
        %v510 = vrcp.pop %v506
        %v511 = vmul.f32 1.0, %v510
        %v512 = vrcp.pop %v507
        %v513 = vmul.f32 1.0, %v512
        %v514 = vrcp.pop %v508
        %v515 = vmul.f32 1.0, %v514
        %v516 = vrcp.pop %v509
        %v517 = vmul.f32 1.0, %v516
        %518 = vst [vmem:[%s273] sm:$0xff] %v511
        %519 = vst.msk [vmem:[%s273 + $0x8] sm:$0xff] %vm410, %v513
        %520 = vst [vmem:[%s273 + $0x10] sm:$0xff] %v515
        %521 = vst.msk [vmem:[%s273 + $0x18] sm:$0xff] %vm410, %v517
        %s522 = sand.u32 %s138, 1
        %s523 = sand.u32 %s138, 1
        %s524 = smul.addr %s523, 32
        %s525 = scalar_lea.vmem [#allocation7], %s524
        // Predicated region
        $region53: #{decoder.1} parent=39 // pred_check
          %p526 = pneg %p148
        $region54: #{decoder.1} parent=39 // pred_check_branch
          %528 = sbr.rel (%p526) target = $region56
        $region55: #{decoder.1} parent=39 // pred_region
          %s529 = smul.u32 2, %s20
          %s530 = ssub.s32 5, %s529
          %p531 = scmp.lt.s32.totalorder %s530, 2
          %s532 = scalar_select %p531, %s530, 2
          %s533 = smul.u32 128, %s532
          %s534 = smul.u32 %s533, 2
          %p535 = scmp.ne.s32.totalorder 0, %s534
          %s536 = smul.addr %s529, 2
          %s537 = smul.addr %s536, 8
          %s538 = scalar_lea.vmem %s5, %s537
          // Predicated region
          $region57: #{decoder.1} parent=55 // pred_check
            %p539 = pneg %p535
          $region58: #{decoder.1} parent=55 // pred_check_branch
            %541 = sbr.rel (%p539) target = $region60
          $region59: #{decoder.1} parent=55 // pred_region
            // Predicated region
            $region61: #{decoder.1} parent=59 // pred_check
              _
            $region62: #{decoder.1} parent=59 // pred_check_branch
              %543 = sbr.rel (0) target = $region64
            $region63: #{decoder.1} parent=59 // pred_region
              %s544 = sshrl.u32 %s532, 1
              // While loop
              $region65: #{decoder.1} parent=63 // loop_pre_header
                _
              $region66: #{decoder.1} parent=63 // loop_header
                %s546 = sphi 0, %s548
                %p547 = scmp.ge.s32.totalorder %s546, %s544
                %s551 = sphi 0, %s564
                %s552 = sphi %s525, %s567
                %s553 = sphi %s538, %s568
              $region67: #{decoder.1} parent=63 // loop_header_branch
                %550 = sbr.rel (%p547) target = $region71
              $region68: #{decoder.1} parent=63 // loop_body
                %v554 = vld [vmem:[%s552] sm:$0xff]
                %555 = vst [vmem:[%s553] sm:$0xff] %v554
                %v556 = vld [vmem:[%s552 + $0x10] sm:$0xff]
                %557 = vst [vmem:[%s553 + $0x10] sm:$0xff] %v556
                %v558 = vld [vmem:[%s552 + $0x8] sm:$0xff]
                %559 = vst [vmem:[%s553 + $0x8] sm:$0xff] %v558
                %v560 = vld [vmem:[%s552 + $0x18] sm:$0xff]
                %561 = vst [vmem:[%s553 + $0x18] sm:$0xff] %v560
                %s562 = sadd.s32 1, %s551
                %p563 = scmp.ge.s32.totalorder %s562, %s544
                %s564 = scalar_select %p563, 0, %s562
                %s565 = smul.u32 %s564, 32
                %s566 = smul.u32 %s564, 32
                %s567 = scalar_lea.vmem %s525, %s565 [#allocation7]
                %s568 = scalar_lea.vmem %s538, %s566
              $region69: #{decoder.1} parent=63 // loop_footer
                %s548 = sadd.s32 %s546, 1
              $region70: #{decoder.1} parent=63 // loop_footer_branch
                %545 = sbr.rel target = $region66
              $region71: #{decoder.1} parent=63 // loop_exit
                _
              %s569 = sshrl.u32 %s532, 1
              %s570 = sand.u32 %s532, 1
              %s571 = smul.u32 %s569, 2
              %s572 = smul.u32 16, %s571
              %s573 = scalar_lea.vmem %s525, %s572 [#allocation7]
              %s574 = smul.u32 16, %s571
              %s575 = scalar_lea.vmem %s538, %s574
              // While loop
              $region72: #{decoder.1} parent=63 // loop_pre_header
                _
              $region73: #{decoder.1} parent=63 // loop_header
                %s577 = sphi 0, %s579
                %p578 = scmp.ge.s32.totalorder %s577, %s570
                %s582 = sphi 0, %s591
                %s583 = sphi %s573, %s594
                %s584 = sphi %s575, %s595
              $region74: #{decoder.1} parent=63 // loop_header_branch
                %581 = sbr.rel (%p578) target = $region78
              $region75: #{decoder.1} parent=63 // loop_body
                %v585 = vld [vmem:[%s583] sm:$0xff]
                %586 = vst [vmem:[%s584] sm:$0xff] %v585
                %v587 = vld [vmem:[%s583 + $0x8] sm:$0xff]
                %588 = vst [vmem:[%s584 + $0x8] sm:$0xff] %v587
                %s589 = sadd.s32 1, %s582
                %p590 = scmp.ge.s32.totalorder %s589, %s570
                %s591 = scalar_select %p590, 0, %s589
                %s592 = smul.u32 %s591, 16
                %s593 = smul.u32 %s591, 16
                %s594 = scalar_lea.vmem %s573, %s592 [#allocation7]
                %s595 = scalar_lea.vmem %s575, %s593
              $region76: #{decoder.1} parent=63 // loop_footer
                %s579 = sadd.s32 %s577, 1
              $region77: #{decoder.1} parent=63 // loop_footer_branch
                %576 = sbr.rel target = $region73
              $region78: #{decoder.1} parent=63 // loop_exit
                _
            $region64: #{decoder.1} parent=59 // pred_fallthru
              _
            // Predicated region
            $region79: #{decoder.1} parent=59 // pred_check
              _
            $region80: #{decoder.1} parent=59 // pred_check_branch
              %597 = sbr.rel target = $region82
            $region81: #{decoder.1} parent=59 // pred_region
              _
            $region82: #{decoder.1} parent=59 // pred_fallthru
              _
          $region60: #{decoder.1} parent=55 // pred_fallthru
            _
          %598 = vnop
        $region56: #{decoder.1} parent=39 // pred_fallthru
          _
      $region40: #{decoder.1} parent=5 // pred_fallthru
        _
      %p599 = scmp.le.s32.totalorder 2, %s15
      // Predicated region
      $region83: #{decoder.1} parent=5 // pred_check
        %p600 = pneg %p599
      $region84: #{decoder.1} parent=5 // pred_check_branch
        %602 = sbr.rel (%p600) target = $region86
      $region85: #{decoder.1} parent=5 // pred_region
        %s603 = ssub.s32 %s15, 2
        // Predicated region
        $region87: #{decoder.1} parent=85 // pred_check
          %p604 = pneg %p154
        $region88: #{decoder.1} parent=85 // pred_check_branch
          %606 = sbr.rel (%p604) target = $region90
        $region89: #{decoder.1} parent=85 // pred_region
          %s607 = sand.u32 %s139, 1
          %s608 = sand.u32 %s139, 1
          %s609 = smul.addr %s608, 32
          %s610 = scalar_lea.vmem [#allocation7], %s609
        $region90: #{decoder.1} parent=85 // pred_fallthru
          _
      $region86: #{decoder.1} parent=5 // pred_fallthru
        _
    $region6: #{decoder.1} parent=1 // loop_footer
      %s19 = sadd.s32 1, %s15
    $region7: #{decoder.1} parent=1 // loop_footer_branch
      %14 = sbr.rel target = $region3
    $region8: #{decoder.1} parent=1 // loop_exit
      _
    %611 = vsyncpa [#allocation3], 1
    %s612 = scalar_lea.sflag [#allocation3], 1
    %613 = vsyncpa %s612, 1
    %614 = vsyncpa [#allocation5], 1

</llo_original>
